<compile_context>
chip_gen: v7x
topology: tpu7x:2x2x1
jax: 0.10.0
libtpu: 0.0.40
codegen_flags: <defaults>
</compile_context>

<pallas_src>
import jax
import jax.numpy as jnp
from jax.experimental import pallas as pl
from jax.experimental.pallas import tpu as pltpu

_LANES = 128
_SEG_ALIGN = 16   # sublane alignment safe for both f32 (8,128) and bf16 (16,128)


def _round_up(n, m):
    return ((n + m - 1) // m) * m


def _param_layout(dim):
    """Static row offsets of each parameter inside the packed (rows, 128) slab."""
    assert dim % 8 == 0, "dim must be a multiple of 8 for clean sublane tiling"
    assert 2 * dim <= _LANES, "2*dim must fit in one 128-lane row (dim <= 64)"
    offs = {}
    r = 0

    def take(name, nrows):
        nonlocal r
        offs[name] = r
        r = _round_up(r + nrows, _SEG_ALIGN)

    take("w1", dim)       # (dim, 2*dim)
    take("b1", 1)         # (1, 2*dim)
    take("w2", 2 * dim)   # (2*dim, dim)
    take("b2", 1)         # (1, dim)
    take("w3", dim)       # (dim, 8)
    take("b3", 1)         # (1, 8)
    take("w4", 1)         # stored transposed as a (1, 8) row
    take("b4", 1)         # (1, 1)
    offs["rows"] = r
    return offs


def pack_params(params, dim, dtype=jnp.bfloat16):
    """Pack all weights/biases into one contiguous lane-padded slab (one DMA)."""
    offs = _param_layout(dim)
    slab = jnp.zeros((offs["rows"], _LANES), dtype)

    def put(s, name, arr):
        r = offs[name]
        h, w = arr.shape
        return s.at[r:r + h, :w].set(arr.astype(dtype))

    slab = put(slab, "w1", params["w1"])
    slab = put(slab, "b1", params["b1"].reshape(1, -1))
    slab = put(slab, "w2", params["w2"])
    slab = put(slab, "b2", params["b2"].reshape(1, -1))
    slab = put(slab, "w3", params["w3"])
    slab = put(slab, "b3", params["b3"].reshape(1, -1))
    slab = put(slab, "w4", params["w4"].reshape(1, -1))  # (8, 1) -> (1, 8)
    slab = put(slab, "b4", params["b4"].reshape(1, -1))
    return slab


def _make_kernel(dim, offs):
    D = dim
    f32 = jnp.float32

    def kernel(x_ref, p_ref, o_ref):
        x = x_ref[...]                      # (TB, D), slab dtype (bf16 or f32)
        cd = x.dtype

        # Static, sublane-aligned slices into the resident parameter slab.
        w1 = p_ref[offs["w1"]:offs["w1"] + D, 0:2 * D]
        b1 = p_ref[offs["b1"]:offs["b1"] + 1, 0:2 * D].astype(f32)
        w2 = p_ref[offs["w2"]:offs["w2"] + 2 * D, 0:D]
        b2 = p_ref[offs["b2"]:offs["b2"] + 1, 0:D].astype(f32)
        w3 = p_ref[offs["w3"]:offs["w3"] + D, 0:8]
        b3 = p_ref[offs["b3"]:offs["b3"] + 1, 0:8].astype(f32)
        w4r = p_ref[offs["w4"]:offs["w4"] + 1, 0:8].astype(f32)   # (1, 8) = w4.T
        b4 = p_ref[offs["b4"]:offs["b4"] + 1, 0:1].astype(f32)    # (1, 1)

        # Dropout layers are eval-mode identities (see TODO at top of file).

        # Linear(dim, 2*dim) -> ReLU          [MXU, f32 accumulation]
        h = jnp.dot(x, w1, preferred_element_type=f32) + b1
        h = jnp.maximum(h, 0.0).astype(cd)

        # Linear(2*dim, dim) -> ReLU          [MXU]
        h = jnp.dot(h, w2, preferred_element_type=f32) + b2
        h = jnp.maximum(h, 0.0).astype(cd)

        # Linear(dim, 8) -> ReLU              [MXU, single push]
        h = jnp.dot(h, w3, preferred_element_type=f32) + b3
        h = jnp.maximum(h, 0.0)              # keep f32 for the final VPU layer

        # Linear(8, 1) -> ReLU on the VPU/XLU (broadcast-mul + lane reduce),
        # keeping the N=1 matmul off the MXU.
        z = jnp.sum(h * w4r, axis=-1, keepdims=True) + b4          # (TB, 1)
        z = jnp.maximum(z, 0.0)

        # Sigmoid on the EUP; store into the narrow (TB, 8) output block.
        y = jax.nn.sigmoid(z)
        o_ref[...] = jnp.broadcast_to(y, o_ref.shape)

    return kernel


def _choose_tile(batch, block_b):
    # Tiles are multiples of 128 rows (safe for both f32 and bf16 tiling) and
    # big enough to amortize the ~0.35 us per-grid-step overhead, but capped so
    # large batches keep >= 2 grid steps ("parallel" axis -> both v7x cores).
    tb = _round_up(max((batch + 1) // 2, 1), _LANES)
    return max(_LANES, min(block_b, tb))


def mnist_discriminator_forward(x, slab, dim, *, block_b=2048):
    """x: (B, dim). slab: packed params from pack_params(). Returns (B, 1) f32."""
    B = x.shape[0]
    offs = _param_layout(dim)
    n_rows = offs["rows"]
    assert slab.shape == (n_rows, _LANES), slab.shape

    x = x.astype(slab.dtype)            # bf16 by default -> half the x DMA bytes
    TB = _choose_tile(B, block_b)
    B_pad = _round_up(B, TB)
    if B_pad != B:
        x = jnp.pad(x, ((0, B_pad - B), (0, 0)))

    flops = 2 * B_pad * (dim * 2 * dim + 2 * dim * dim + dim * 8 + 8)
    bytes_accessed = (x.size * x.dtype.itemsize
                      + slab.size * slab.dtype.itemsize
                      + B_pad * 8 * 4)

    out = pl.pallas_call(
        _make_kernel(dim, offs),
        out_shape=jax.ShapeDtypeStruct((B_pad, 8), jnp.float32),
        grid=(B_pad // TB,),
        in_specs=[
            pl.BlockSpec((TB, dim), lambda i: (i, 0)),          # activations: batch-tiled
            pl.BlockSpec((n_rows, _LANES), lambda i: (0, 0)),   # params: resident in VMEM
        ],
        out_specs=pl.BlockSpec((TB, 8), lambda i: (i, 0)),      # narrow writeback
        compiler_params=pltpu.CompilerParams(
            dimension_semantics=("parallel",)),
        cost_estimate=pl.CostEstimate(
            flops=int(flops),
            transcendentals=int(B_pad),
            bytes_accessed=int(bytes_accessed)),
    )(x, slab)

    return out[:B, :1]


def init_params(key, dim):
    """Deterministic init mimicking nn.Linear's U(-1/sqrt(in), 1/sqrt(in)).

    W is stored as (in, out) (transpose of PyTorch), bias as (1, out).
    """
    sizes = [(dim, 2 * dim), (2 * dim, dim), (dim, 8), (8, 1)]
    params = {}
    keys = jax.random.split(key, 2 * len(sizes))
    for i, (fan_in, fan_out) in enumerate(sizes):
        bound = 1.0 / jnp.sqrt(fan_in)
        params[f"w{i + 1}"] = jax.random.uniform(
            keys[2 * i], (fan_in, fan_out), minval=-bound, maxval=bound,
            dtype=jnp.float32)
        params[f"b{i + 1}"] = jax.random.uniform(
            keys[2 * i + 1], (1, fan_out), minval=-bound, maxval=bound,
            dtype=jnp.float32)
    return params


def reference_forward(x, params, compute_dtype=jnp.float32):
    """Pure-JAX reference mirroring the kernel's mixed-precision scheme."""
    cd = compute_dtype
    f32 = jnp.float32
    h = x.astype(cd)
    for i, keep_f32 in ((1, False), (2, False), (3, True)):
        w = params[f"w{i}"].astype(cd)
        b = params[f"b{i}"].astype(cd).astype(f32)
        h = jnp.maximum(jnp.dot(h, w, preferred_element_type=f32) + b, 0.0)
        if not keep_f32:
            h = h.astype(cd)
    w4 = params["w4"].astype(cd).astype(f32).reshape(1, -1)
    b4 = params["b4"].astype(cd).astype(f32)
    z = jnp.maximum(jnp.sum(h * w4, axis=-1, keepdims=True) + b4, 0.0)
    return jax.nn.sigmoid(z)


if __name__ == "__main__":
    dim = 32     # args.dim
    batch = 8

    key = jax.random.PRNGKey(0)
    k_x, k_p, k_x2 = jax.random.split(key, 3)
    x = jax.random.normal(k_x, (batch, dim), dtype=jnp.float32)
    params = init_params(k_p, dim)

    # Default (recommended) path: bf16 MXU inputs, f32 accumulation.
    slab_bf16 = pack_params(params, dim, dtype=jnp.bfloat16)
    out = jax.block_until_ready(mnist_discriminator_forward(x, slab_bf16, dim))
    ref_bf16 = reference_forward(x, params, compute_dtype=jnp.bfloat16)
    ref_f32 = reference_forward(x, params, compute_dtype=jnp.float32)
    assert out.shape == (batch, 1), out.shape
    assert jnp.allclose(out, ref_bf16, atol=1e-3, rtol=1e-3), (out, ref_bf16)
    assert jnp.allclose(out, ref_f32, atol=3e-2, rtol=3e-2), (out, ref_f32)

    # Full-f32 path (exact vs. the f32 reference) + multi-step grid + batch
    # padding (B=260 with TB=256 -> grid=2, pad to 512).
    slab_f32 = pack_params(params, dim, dtype=jnp.float32)
    x2 = jax.random.normal(k_x2, (260, dim), dtype=jnp.float32)
    out2 = jax.block_until_ready(
        mnist_discriminator_forward(x2, slab_f32, dim, block_b=256))
    ref2 = reference_forward(x2, params, compute_dtype=jnp.float32)
    assert out2.shape == (260, 1), out2.shape
    assert jnp.allclose(out2, ref2, atol=1e-5, rtol=1e-5), (out2, ref2)

    # bf16 path with a multi-step grid as well.
    out3 = jax.block_until_ready(
        mnist_discriminator_forward(x2, slab_bf16, dim, block_b=256))
    ref3 = reference_forward(x2, params, compute_dtype=jnp.bfloat16)
    assert out3.shape == (260, 1), out3.shape
    assert jnp.allclose(out3, ref3, atol=1e-3, rtol=1e-3), (out3, ref3)

    print("KERNEL_OK")
</pallas_src>

<mosaic_0001>
module attributes {stable_mosaic.version = 11 : i64} {
  func.func @kernel(%arg0: i32, %arg1: memref<128x32xbf16, #tpu.memory_space<vmem>>, %arg2: memref<208x128xbf16, #tpu.memory_space<vmem>>, %arg3: memref<128x8xf32, #tpu.memory_space<vmem>>) attributes {dimension_semantics = [#tpu.dimension_semantics<parallel>], iteration_bounds = array<i64: 1>, scalar_prefetch = 0 : i64, scratch_operands = 0 : i64, tpu.core_type = #tpu.core_type<tc>, window_params = [{transform_indices = @transform_0, window_bounds = array<i64: 128, 32>}, {pipeline_mode = #tpu.pipeline_mode<synchronous>, transform_indices = @transform_1, window_bounds = array<i64: 208, 128>}, {transform_indices = @transform_2, window_bounds = array<i64: 128, 8>}]} {
    %c0 = arith.constant 0 : index
    %c0_0 = arith.constant 0 : index
    %0 = vector.load %arg1[%c0, %c0_0] : memref<128x32xbf16, #tpu.memory_space<vmem>>, vector<128x32xbf16>
    %c0_1 = arith.constant 0 : index
    %c0_2 = arith.constant 0 : index
    %1 = vector.load %arg2[%c0_1, %c0_2] : memref<208x128xbf16, #tpu.memory_space<vmem>>, vector<32x64xbf16>
    %c32 = arith.constant 32 : index
    %c0_3 = arith.constant 0 : index
    %2 = vector.load %arg2[%c32, %c0_3] : memref<208x128xbf16, #tpu.memory_space<vmem>>, vector<1x64xbf16>
    %3 = arith.extf %2 : vector<1x64xbf16> to vector<1x64xf32>
    %c48 = arith.constant 48 : index
    %c0_4 = arith.constant 0 : index
    %4 = vector.load %arg2[%c48, %c0_4] : memref<208x128xbf16, #tpu.memory_space<vmem>>, vector<64x32xbf16>
    %c112 = arith.constant 112 : index
    %c0_5 = arith.constant 0 : index
    %5 = vector.load %arg2[%c112, %c0_5] : memref<208x128xbf16, #tpu.memory_space<vmem>>, vector<1x32xbf16>
    %6 = arith.extf %5 : vector<1x32xbf16> to vector<1x32xf32>
    %c128 = arith.constant 128 : index
    %c0_6 = arith.constant 0 : index
    %7 = vector.load %arg2[%c128, %c0_6] : memref<208x128xbf16, #tpu.memory_space<vmem>>, vector<32x8xbf16>
    %c160 = arith.constant 160 : index
    %c0_7 = arith.constant 0 : index
    %8 = vector.load %arg2[%c160, %c0_7] : memref<208x128xbf16, #tpu.memory_space<vmem>>, vector<1x8xbf16>
    %9 = arith.extf %8 : vector<1x8xbf16> to vector<1x8xf32>
    %c176 = arith.constant 176 : index
    %c0_8 = arith.constant 0 : index
    %10 = vector.load %arg2[%c176, %c0_8] : memref<208x128xbf16, #tpu.memory_space<vmem>>, vector<1x8xbf16>
    %11 = arith.extf %10 : vector<1x8xbf16> to vector<1x8xf32>
    %c192 = arith.constant 192 : index
    %c0_9 = arith.constant 0 : index
    %12 = vector.load %arg2[%c192, %c0_9] : memref<208x128xbf16, #tpu.memory_space<vmem>>, vector<1x1xbf16>
    %13 = arith.extf %12 : vector<1x1xbf16> to vector<1x1xf32>
    %cst = arith.constant dense<0.000000e+00> : vector<128x64xf32>
    %14 = tpu.matmul %0, %1, %cst {dimension_numbers = #tpu.dot_dimension_numbers<[1], [0], [0], [1], [0, 0, 1, 1], [], []>} : vector<128x32xbf16>, vector<32x64xbf16>, vector<128x64xf32> -> vector<128x64xf32>
    %15 = vector.broadcast %3 : vector<1x64xf32> to vector<128x64xf32>
    %16 = arith.addf %14, %15 : vector<128x64xf32>
    %cst_10 = arith.constant 0.000000e+00 : f32
    %17 = vector.broadcast %cst_10 : f32 to vector<128x64xf32>
    %18 = arith.maximumf %16, %17 : vector<128x64xf32>
    %19 = arith.truncf %18 : vector<128x64xf32> to vector<128x64xbf16>
    %cst_11 = arith.constant dense<0.000000e+00> : vector<128x32xf32>
    %20 = tpu.matmul %19, %4, %cst_11 {dimension_numbers = #tpu.dot_dimension_numbers<[1], [0], [0], [1], [0, 0, 1, 1], [], []>} : vector<128x64xbf16>, vector<64x32xbf16>, vector<128x32xf32> -> vector<128x32xf32>
    %21 = vector.broadcast %6 : vector<1x32xf32> to vector<128x32xf32>
    %22 = arith.addf %20, %21 : vector<128x32xf32>
    %cst_12 = arith.constant 0.000000e+00 : f32
    %23 = vector.broadcast %cst_12 : f32 to vector<128x32xf32>
    %24 = arith.maximumf %22, %23 : vector<128x32xf32>
    %25 = arith.truncf %24 : vector<128x32xf32> to vector<128x32xbf16>
    %cst_13 = arith.constant dense<0.000000e+00> : vector<128x8xf32>
    %26 = tpu.matmul %25, %7, %cst_13 {dimension_numbers = #tpu.dot_dimension_numbers<[1], [0], [0], [1], [0, 0, 1, 1], [], []>} : vector<128x32xbf16>, vector<32x8xbf16>, vector<128x8xf32> -> vector<128x8xf32>
    %27 = vector.broadcast %9 : vector<1x8xf32> to vector<128x8xf32>
    %28 = arith.addf %26, %27 : vector<128x8xf32>
    %cst_14 = arith.constant 0.000000e+00 : f32
    %29 = vector.broadcast %cst_14 : f32 to vector<128x8xf32>
    %30 = arith.maximumf %28, %29 : vector<128x8xf32>
    %31 = vector.broadcast %11 : vector<1x8xf32> to vector<128x8xf32>
    %32 = arith.mulf %30, %31 : vector<128x8xf32>
    %cst_15 = arith.constant dense<0.000000e+00> : vector<128xf32>
    %33 = vector.multi_reduction <add>, %32, %cst_15 [1] : vector<128x8xf32> to vector<128xf32>
    %34 = vector.shape_cast %33 : vector<128xf32> to vector<128x1xf32>
    %35 = vector.broadcast %13 : vector<1x1xf32> to vector<128x1xf32>
    %36 = arith.addf %34, %35 : vector<128x1xf32>
    %cst_16 = arith.constant 0.000000e+00 : f32
    %37 = vector.broadcast %cst_16 : f32 to vector<128x1xf32>
    %38 = arith.maximumf %36, %37 : vector<128x1xf32>
    %39 = arith.negf %38 : vector<128x1xf32>
    %40 = math.exp %39 : vector<128x1xf32>
    %cst_17 = arith.constant 1.000000e+00 : f32
    %41 = vector.broadcast %cst_17 : f32 to vector<128x1xf32>
    %42 = arith.addf %41, %40 : vector<128x1xf32>
    %43 = arith.divf %41, %42 : vector<128x1xf32>
    %44 = vector.shape_cast %43 : vector<128x1xf32> to vector<128x1xf32>
    %45 = vector.broadcast %44 : vector<128x1xf32> to vector<128x8xf32>
    %c0_18 = arith.constant 0 : index
    %c0_19 = arith.constant 0 : index
    %46 = vector.load %arg3[%c0_18, %c0_19] : memref<128x8xf32, #tpu.memory_space<vmem>>, vector<128x8xf32>
    tpu.vector_store %arg3[%c0_18, %c0_19], %45 {strides = array<i32>} : memref<128x8xf32, #tpu.memory_space<vmem>>, vector<128x8xf32>,
    return
  }
  func.func @transform_0(%arg0: i32) -> (i32, i32) {
    %c0_i32 = arith.constant 0 : i32
    %c0_i32_0 = arith.constant 0 : i32
    return %arg0, %c0_i32 : i32, i32
  }
  func.func @transform_1(%arg0: i32) -> (i32, i32) {
    %c0_i32 = arith.constant 0 : i32
    %c0_i32_0 = arith.constant 0 : i32
    %c0_i32_1 = arith.constant 0 : i32
    return %c0_i32, %c0_i32_0 : i32, i32
  }
  func.func @transform_2(%arg0: i32) -> (i32, i32) {
    %c0_i32 = arith.constant 0 : i32
    %c0_i32_0 = arith.constant 0 : i32
    return %arg0, %c0_i32 : i32, i32
  }
}

</mosaic_0001>

<llo_original>
// kernel: tpu_custom_call.1
$region0: #{tpu_custom_call.1}
  #allocation0 [shape = 'u32[]', space=smem, size = 0x4, offset = 0x4, fixed_abs, tag = 'smem constant byte address 0x4 - core index']
  #allocation1 [shape = 'u32[144,128]{1,0:T(1,128)}', space=vmem, size = 0x12000, scoped, tag = 'internal scratch']
  %s0 = inlined_call_operand.vmem [shape: bf16[128,32], index: 0, kind: input, shape index: {}]
  %s1 = inlined_call_operand.hbm [shape: bf16[208,128], index: 1, kind: input, shape index: {}]
  %s2 = inlined_call_operand.vmem [shape: f32[128,8], index: 2, kind: output, shape index: {}]
  %s3 = sld [smem:[#allocation0]]
  $region22: #{tpu_custom_call.1} parent=0
    _
  %s5 = ssub.s32 1, %s3
  %s6 = scalar_select 0, %s5, %s3
  $region1: #{tpu_custom_call.1} parent=0
    #allocation2 [shape = 'u8[53248]{0}', space=vmem, size = 0xd000, scoped, tag = 'input window, operand 1, single buffered']
    #allocation3 [shape = 's32[1]{0}', space=sflag, size = 0x4, scoped, tag = 'scoped memory for tpu_custom_call.1']
    %7 = vsyncpa [#allocation3], 0
    // Predicated region
    $region2: #{tpu_custom_call.1} parent=1 // pred_check
      _
    $region3: #{tpu_custom_call.1} parent=1 // pred_check_branch
      %9 = sbr.rel (0) target = $region5
    $region4: #{tpu_custom_call.1} parent=1 // pred_region
      _
    $region5: #{tpu_custom_call.1} parent=1 // pred_fallthru
      _
    // Predicated region
    $region6: #{tpu_custom_call.1} parent=1 // pred_check
      _
    $region7: #{tpu_custom_call.1} parent=1 // pred_check_branch
      %11 = sbr.rel (0) target = $region9
    $region8: #{tpu_custom_call.1} parent=1 // pred_region
      %s13 = ssub.s32 1664, 1664
      %14 = vsyncadd [#allocation3], %s13
      %s15 = sshll.u32 [#allocation2], 4
      %s16 = int_to_ptr.vmem [resolvable:$true] %s15
      %21 = dma.hbm_to_vmem [thread:$0]  %s1, 1664, %s16, [#allocation3], 64, 64, 4
    $region9: #{tpu_custom_call.1} parent=1 // pred_fallthru
      _
    // Predicated region
    $region10: #{tpu_custom_call.1} parent=1 // pred_check
      _
    $region11: #{tpu_custom_call.1} parent=1 // pred_check_branch
      %23 = sbr.rel (0) target = $region13
    $region12: #{tpu_custom_call.1} parent=1 // pred_region
      %24 = dma.done [#allocation3], 1664
    $region13: #{tpu_custom_call.1} parent=1 // pred_fallthru
      _
    %v26 = vld [vmem:[%s0] sm:$0xf]
    %v27 = vld [vmem:[%s0 + $0x4] sm:$0xf]
    %v28 = vld [vmem:[%s0 + $0x8] sm:$0xf]
    %v29 = vld [vmem:[%s0 + $0xc] sm:$0xf]
    %v30 = vld [vmem:[%s0 + $0x10] sm:$0xf]
    %v31 = vld [vmem:[%s0 + $0x14] sm:$0xf]
    %v32 = vld [vmem:[%s0 + $0x18] sm:$0xf]
    %v33 = vld [vmem:[%s0 + $0x1c] sm:$0xf]
    %v34 = vld [vmem:[%s0 + $0x20] sm:$0xf]
    %v35 = vld [vmem:[%s0 + $0x24] sm:$0xf]
    %v36 = vld [vmem:[%s0 + $0x28] sm:$0xf]
    %v37 = vld [vmem:[%s0 + $0x2c] sm:$0xf]
    %v38 = vld [vmem:[%s0 + $0x30] sm:$0xf]
    %v39 = vld [vmem:[%s0 + $0x34] sm:$0xf]
    %v40 = vld [vmem:[%s0 + $0x38] sm:$0xf]
    %v41 = vld [vmem:[%s0 + $0x3c] sm:$0xf]
    %v42 = vld [vmem:[#allocation2] sm:$0xf]
    %v43 = vld [vmem:[#allocation2 + $0x4] sm:$0xf]
    %v44 = vld [vmem:[#allocation2 + $0x8] sm:$0xf]
    %v45 = vld [vmem:[#allocation2 + $0xc] sm:$0xf]
    %v46 = vld [vmem:[#allocation2 + $0x10] sm:$0x1]
    %v47 = vunpack.c.l.bf16 %v46
    %v48 = vld [vmem:[#allocation2 + $0x18] sm:$0xf]
    %v49 = vld [vmem:[#allocation2 + $0x1c] sm:$0xf]
    %v50 = vld [vmem:[#allocation2 + $0x20] sm:$0xf]
    %v51 = vld [vmem:[#allocation2 + $0x24] sm:$0xf]
    %v52 = vld [vmem:[#allocation2 + $0x28] sm:$0xf]
    %v53 = vld [vmem:[#allocation2 + $0x2c] sm:$0xf]
    %v54 = vld [vmem:[#allocation2 + $0x30] sm:$0xf]
    %v55 = vld [vmem:[#allocation2 + $0x34] sm:$0xf]
    %v56 = vld [vmem:[#allocation2 + $0x38] sm:$0x1]
    %v57 = vunpack.c.l.bf16 %v56
    %v58 = vld [vmem:[#allocation2 + $0x40] sm:$0xf]
    %v59 = vld [vmem:[#allocation2 + $0x44] sm:$0xf]
    %v60 = vld [vmem:[#allocation2 + $0x48] sm:$0xf]
    %v61 = vld [vmem:[#allocation2 + $0x4c] sm:$0xf]
    %v62 = vld [vmem:[#allocation2 + $0x50] sm:$0x1]
    %v63 = vunpack.c.l.bf16 %v62
    %v64 = vld [vmem:[#allocation2 + $0x58] sm:$0x1]
    %v65 = vunpack.c.l.bf16 %v64
    %v66 = vld [vmem:[#allocation2 + $0x60] sm:$0x1]
    %v67 = vunpack.c.l.bf16 %v66
    %v68 = vlaneseq
    %v69 = vshrl.u32 %v68, 7
    %v70 = vsub.s32 0, %v69
    %v71 = vrot.slane %v47, %v70
    %v88 = vunpack.c.l.b16 %v26
    %v89 = vunpack.c.l.b16 %v27
    %v90 = vunpack.c.l.b16 %v28
    %v91 = vunpack.c.l.b16 %v29
    %v92 = vunpack.c.l.b16 %v30
    %v93 = vunpack.c.l.b16 %v31
    %v94 = vunpack.c.l.b16 %v32
    %v95 = vunpack.c.l.b16 %v33
    %v96 = vunpack.c.l.b16 %v34
    %v97 = vunpack.c.l.b16 %v35
    %v98 = vunpack.c.l.b16 %v36
    %v99 = vunpack.c.l.b16 %v37
    %v100 = vunpack.c.l.b16 %v38
    %v101 = vunpack.c.l.b16 %v39
    %v102 = vunpack.c.l.b16 %v40
    %v103 = vunpack.c.l.b16 %v41
    %v104 = vpack.c.b16 %v89, %v88
    %v105 = vpack.c.b16 %v91, %v90
    %v106 = vpack.c.b16 %v93, %v92
    %v107 = vpack.c.b16 %v95, %v94
    %v108 = vpack.c.b16 %v97, %v96
    %v109 = vpack.c.b16 %v99, %v98
    %v110 = vpack.c.b16 %v101, %v100
    %v111 = vpack.c.b16 %v103, %v102
    %v116 = vunpack.c.l.b16 %v42
    %v117 = vunpack.c.l.b16 %v43
    %v118 = vunpack.c.l.b16 %v44
    %v119 = vunpack.c.l.b16 %v45
    %v120 = vpack.c.b16 %v117, %v116
    %v121 = vpack.c.b16 %v119, %v118
    %vm124 = vcmask 261120
    %v126 = vsel %vm124, %v104, 0
    %v129 = vsel %vm124, %v105, 0
    %v132 = vsel %vm124, %v106, 0
    %v135 = vsel %vm124, %v107, 0
    %v138 = vsel %vm124, %v108, 0
    %v141 = vsel %vm124, %v109, 0
    %v144 = vsel %vm124, %v110, 0
    %v147 = vsel %vm124, %v111, 0
    %149 = vmatprep.subr.bf16.mxu0 0
    %150 = vmatpush1.bf16.msra.mxu0 %v120
    %151 = vmatprep.subr.bf16.mxu0 0
    %152 = vmatpush1.bf16.msra.mxu0 %v121
    %153 = vmatprep.subr.bf16.mxu0 0
    %154 = vmatpush1.bf16.msra.mxu0 0
    %155 = vmatprep.subr.bf16.mxu0 0
    %156 = vmatpush1.bf16.msra.mxu0 0
    %157 = vmatprep.subr.bf16.mxu0 0
    %158 = vmatpush1.bf16.msra.mxu0 0
    %159 = vmatprep.subr.bf16.mxu0 0
    %160 = vmatpush1.bf16.msra.mxu0 0
    %161 = vmatprep.subr.bf16.mxu0 0
    %162 = vmatpush1.bf16.msra.mxu0 0
    %163 = vmatprep.subr.bf16.mxu0 0
    %164 = vmatpush1.bf16.msra.mxu0 0
    %165 = vmatprep.subr.bf16.mxu0 0
    %166 = vmatpush1.bf16.msra.mxu0 0
    %167 = vmatprep.subr.bf16.mxu0 0
    %168 = vmatpush1.bf16.msra.mxu0 0
    %169 = vmatprep.subr.bf16.mxu0 0
    %170 = vmatpush1.bf16.msra.mxu0 0
    %171 = vmatprep.subr.bf16.mxu0 0
    %172 = vmatpush1.bf16.msra.mxu0 0
    %173 = vmatprep.subr.bf16.mxu0 0
    %174 = vmatpush1.bf16.msra.mxu0 0
    %175 = vmatprep.subr.bf16.mxu0 0
    %176 = vmatpush1.bf16.msra.mxu0 0
    %177 = vmatprep.subr.bf16.mxu0 0
    %178 = vmatpush1.bf16.msra.mxu0 0
    %179 = vmatprep.subr.bf16.mxu0 0
    %180 = vmatpush1.bf16.msra.mxu0 0
    %181 = vmatprep.mubr.bf16.mxu0 0
    %182 = vmatmul.mubr.bf16.gmra.mrb[0].mxu0 %v126
    %v183 = vpop.f32.mrb[0].mxu0
    %v184 = vadd.f32 %v71, %v183
    %v185 = vpop.f32.mrb[0].mxu0
    %v186 = vpop.f32.mrb[0].mxu0
    %v187 = vadd.f32 %v71, %v186
    %v188 = vpop.f32.mrb[0].mxu0
    %189 = vmatprep.mubr.bf16.mxu0 0
    %190 = vmatmul.mubr.bf16.gmra.mrb[0].mxu0 %v129
    %v191 = vpop.f32.mrb[0].mxu0
    %v192 = vadd.f32 %v71, %v191
    %v193 = vpop.f32.mrb[0].mxu0
    %v194 = vpop.f32.mrb[0].mxu0
    %v195 = vadd.f32 %v71, %v194
    %v196 = vpop.f32.mrb[0].mxu0
    %197 = vmatprep.mubr.bf16.mxu0 0
    %198 = vmatmul.mubr.bf16.gmra.mrb[0].mxu0 %v132
    %v199 = vpop.f32.mrb[0].mxu0
    %v200 = vadd.f32 %v71, %v199
    %v201 = vpop.f32.mrb[0].mxu0
    %v202 = vpop.f32.mrb[0].mxu0
    %v203 = vadd.f32 %v71, %v202
    %v204 = vpop.f32.mrb[0].mxu0
    %205 = vmatprep.mubr.bf16.mxu0 0
    %206 = vmatmul.mubr.bf16.gmra.mrb[0].mxu0 %v135
    %v207 = vpop.f32.mrb[0].mxu0
    %v208 = vadd.f32 %v71, %v207
    %v209 = vpop.f32.mrb[0].mxu0
    %v210 = vpop.f32.mrb[0].mxu0
    %v211 = vadd.f32 %v71, %v210
    %v212 = vpop.f32.mrb[0].mxu0
    %213 = vmatprep.mubr.bf16.mxu0 0
    %214 = vmatmul.mubr.bf16.gmra.mrb[0].mxu0 %v138
    %v215 = vpop.f32.mrb[0].mxu0
    %v216 = vadd.f32 %v71, %v215
    %v217 = vpop.f32.mrb[0].mxu0
    %v218 = vpop.f32.mrb[0].mxu0
    %v219 = vadd.f32 %v71, %v218
    %v220 = vpop.f32.mrb[0].mxu0
    %221 = vmatprep.mubr.bf16.mxu0 0
    %222 = vmatmul.mubr.bf16.gmra.mrb[0].mxu0 %v141
    %v223 = vpop.f32.mrb[0].mxu0
    %v224 = vadd.f32 %v71, %v223
    %v225 = vpop.f32.mrb[0].mxu0
    %v226 = vpop.f32.mrb[0].mxu0
    %v227 = vadd.f32 %v71, %v226
    %v228 = vpop.f32.mrb[0].mxu0
    %229 = vmatprep.mubr.bf16.mxu0 0
    %230 = vmatmul.mubr.bf16.gmra.mrb[0].mxu0 %v144
    %v231 = vpop.f32.mrb[0].mxu0
    %v232 = vadd.f32 %v71, %v231
    %v233 = vpop.f32.mrb[0].mxu0
    %v234 = vpop.f32.mrb[0].mxu0
    %v235 = vadd.f32 %v71, %v234
    %v236 = vpop.f32.mrb[0].mxu0
    %237 = vmatprep.mubr.bf16.mxu0 0
    %238 = vmatmul.mubr.bf16.gmra.mrb[0].mxu0 %v147
    %v239 = vpop.f32.mrb[0].mxu0
    %v240 = vadd.f32 %v71, %v239
    %v241 = vpop.f32.mrb[0].mxu0
    %v242 = vpop.f32.mrb[0].mxu0
    %v243 = vadd.f32 %v71, %v242
    %v244 = vpop.f32.mrb[0].mxu0
    %245 = vdwg.mxu0
    %v246 = vmax.f32 %v184, 0.0
    %v247 = vmax.f32 %v187, 0.0
    %v248 = vmax.f32 %v192, 0.0
    %v249 = vmax.f32 %v195, 0.0
    %v250 = vmax.f32 %v200, 0.0
    %v251 = vmax.f32 %v203, 0.0
    %v252 = vmax.f32 %v208, 0.0
    %v253 = vmax.f32 %v211, 0.0
    %v254 = vmax.f32 %v216, 0.0
    %v255 = vmax.f32 %v219, 0.0
    %v256 = vmax.f32 %v224, 0.0
    %v257 = vmax.f32 %v227, 0.0
    %v258 = vmax.f32 %v232, 0.0
    %v259 = vmax.f32 %v235, 0.0
    %v260 = vmax.f32 %v240, 0.0
    %v261 = vmax.f32 %v243, 0.0
    %v262 = vpack.c.bf16 %v247, %v246
    %v263 = vpack.c.bf16 %v249, %v248
    %v264 = vpack.c.bf16 %v251, %v250
    %v265 = vpack.c.bf16 %v253, %v252
    %v266 = vpack.c.bf16 %v255, %v254
    %v267 = vpack.c.bf16 %v257, %v256
    %v268 = vpack.c.bf16 %v259, %v258
    %v269 = vpack.c.bf16 %v261, %v260
    %v270 = vlaneseq
    %v271 = vshrl.u32 %v270, 7
    %v272 = vsub.s32 0, %v271
    %v273 = vrot.slane %v57, %v272
    %v282 = vunpack.c.l.b16 %v48
    %v283 = vunpack.c.l.b16 %v49
    %v284 = vunpack.c.l.b16 %v50
    %v285 = vunpack.c.l.b16 %v51
    %v286 = vunpack.c.l.b16 %v52
    %v287 = vunpack.c.l.b16 %v53
    %v288 = vunpack.c.l.b16 %v54
    %v289 = vunpack.c.l.b16 %v55
    %v290 = vpack.c.b16 %v283, %v282
    %v291 = vpack.c.b16 %v285, %v284
    %v292 = vpack.c.b16 %v287, %v286
    %v293 = vpack.c.b16 %v289, %v288
    %vm298 = vcmask 523264
    %v300 = vsel %vm298, %v262, 0
    %v303 = vsel %vm298, %v263, 0
    %v306 = vsel %vm298, %v264, 0
    %v309 = vsel %vm298, %v265, 0
    %v312 = vsel %vm298, %v266, 0
    %v315 = vsel %vm298, %v267, 0
    %v318 = vsel %vm298, %v268, 0
    %v321 = vsel %vm298, %v269, 0
    %323 = vmatprep.subr.bf16.mxu0 0
    %324 = vmatpush1.bf16.msra.mxu0 %v290
    %325 = vmatprep.subr.bf16.mxu0 0
    %326 = vmatpush1.bf16.msra.mxu0 %v291
    %327 = vmatprep.subr.bf16.mxu0 0
    %328 = vmatpush1.bf16.msra.mxu0 %v292
    %329 = vmatprep.subr.bf16.mxu0 0
    %330 = vmatpush1.bf16.msra.mxu0 %v293
    %331 = vmatprep.subr.bf16.mxu0 0
    %332 = vmatpush1.bf16.msra.mxu0 0
    %333 = vmatprep.subr.bf16.mxu0 0
    %334 = vmatpush1.bf16.msra.mxu0 0
    %335 = vmatprep.subr.bf16.mxu0 0
    %336 = vmatpush1.bf16.msra.mxu0 0
    %337 = vmatprep.subr.bf16.mxu0 0
    %338 = vmatpush1.bf16.msra.mxu0 0
    %339 = vmatprep.subr.bf16.mxu0 0
    %340 = vmatpush1.bf16.msra.mxu0 0
    %341 = vmatprep.subr.bf16.mxu0 0
    %342 = vmatpush1.bf16.msra.mxu0 0
    %343 = vmatprep.subr.bf16.mxu0 0
    %344 = vmatpush1.bf16.msra.mxu0 0
    %345 = vmatprep.subr.bf16.mxu0 0
    %346 = vmatpush1.bf16.msra.mxu0 0
    %347 = vmatprep.subr.bf16.mxu0 0
    %348 = vmatpush1.bf16.msra.mxu0 0
    %349 = vmatprep.subr.bf16.mxu0 0
    %350 = vmatpush1.bf16.msra.mxu0 0
    %351 = vmatprep.subr.bf16.mxu0 0
    %352 = vmatpush1.bf16.msra.mxu0 0
    %353 = vmatprep.subr.bf16.mxu0 0
    %354 = vmatpush1.bf16.msra.mxu0 0
    %355 = vmatprep.mubr.bf16.mxu0 0
    %356 = vmatmul.mubr.bf16.gmra.mrb[0].mxu0 %v300
    %v357 = vpop.f32.mrb[0].mxu0
    %v358 = vadd.f32 %v273, %v357
    %v359 = vpop.f32.mrb[0].mxu0
    %v360 = vpop.f32.mrb[0].mxu0
    %v361 = vadd.f32 %v273, %v360
    %v362 = vpop.f32.mrb[0].mxu0
    %363 = vmatprep.mubr.bf16.mxu0 0
    %364 = vmatmul.mubr.bf16.gmra.mrb[0].mxu0 %v303
    %v365 = vpop.f32.mrb[0].mxu0
    %v366 = vadd.f32 %v273, %v365
    %v367 = vpop.f32.mrb[0].mxu0
    %v368 = vpop.f32.mrb[0].mxu0
    %v369 = vadd.f32 %v273, %v368
    %v370 = vpop.f32.mrb[0].mxu0
    %371 = vmatprep.mubr.bf16.mxu0 0
    %372 = vmatmul.mubr.bf16.gmra.mrb[0].mxu0 %v306
    %v373 = vpop.f32.mrb[0].mxu0
    %v374 = vadd.f32 %v273, %v373
    %v375 = vpop.f32.mrb[0].mxu0
    %v376 = vpop.f32.mrb[0].mxu0
    %v377 = vadd.f32 %v273, %v376
    %v378 = vpop.f32.mrb[0].mxu0
    %379 = vmatprep.mubr.bf16.mxu0 0
    %380 = vmatmul.mubr.bf16.gmra.mrb[0].mxu0 %v309
    %v381 = vpop.f32.mrb[0].mxu0
    %v382 = vadd.f32 %v273, %v381
    %v383 = vpop.f32.mrb[0].mxu0
    %v384 = vpop.f32.mrb[0].mxu0
    %v385 = vadd.f32 %v273, %v384
    %v386 = vpop.f32.mrb[0].mxu0
    %387 = vmatprep.mubr.bf16.mxu0 0
    %388 = vmatmul.mubr.bf16.gmra.mrb[0].mxu0 %v312
    %v389 = vpop.f32.mrb[0].mxu0
    %v390 = vadd.f32 %v273, %v389
    %v391 = vpop.f32.mrb[0].mxu0
    %v392 = vpop.f32.mrb[0].mxu0
    %v393 = vadd.f32 %v273, %v392
    %v394 = vpop.f32.mrb[0].mxu0
    %395 = vmatprep.mubr.bf16.mxu0 0
    %396 = vmatmul.mubr.bf16.gmra.mrb[0].mxu0 %v315
    %v397 = vpop.f32.mrb[0].mxu0
    %v398 = vadd.f32 %v273, %v397
    %v399 = vpop.f32.mrb[0].mxu0
    %v400 = vpop.f32.mrb[0].mxu0
    %v401 = vadd.f32 %v273, %v400
    %v402 = vpop.f32.mrb[0].mxu0
    %403 = vmatprep.mubr.bf16.mxu0 0
    %404 = vmatmul.mubr.bf16.gmra.mrb[0].mxu0 %v318
    %v405 = vpop.f32.mrb[0].mxu0
    %v406 = vadd.f32 %v273, %v405
    %v407 = vpop.f32.mrb[0].mxu0
    %v408 = vpop.f32.mrb[0].mxu0
    %v409 = vadd.f32 %v273, %v408
    %v410 = vpop.f32.mrb[0].mxu0
    %411 = vmatprep.mubr.bf16.mxu0 0
    %412 = vmatmul.mubr.bf16.gmra.mrb[0].mxu0 %v321
    %v413 = vpop.f32.mrb[0].mxu0
    %v414 = vadd.f32 %v273, %v413
    %v415 = vpop.f32.mrb[0].mxu0
    %v416 = vpop.f32.mrb[0].mxu0
    %v417 = vadd.f32 %v273, %v416
    %v418 = vpop.f32.mrb[0].mxu0
    %419 = vdwg.mxu0
    %v420 = vmax.f32 %v358, 0.0
    %v421 = vmax.f32 %v361, 0.0
    %v422 = vmax.f32 %v366, 0.0
    %v423 = vmax.f32 %v369, 0.0
    %v424 = vmax.f32 %v374, 0.0
    %v425 = vmax.f32 %v377, 0.0
    %v426 = vmax.f32 %v382, 0.0
    %v427 = vmax.f32 %v385, 0.0
    %v428 = vmax.f32 %v390, 0.0
    %v429 = vmax.f32 %v393, 0.0
    %v430 = vmax.f32 %v398, 0.0
    %v431 = vmax.f32 %v401, 0.0
    %v432 = vmax.f32 %v406, 0.0
    %v433 = vmax.f32 %v409, 0.0
    %v434 = vmax.f32 %v414, 0.0
    %v435 = vmax.f32 %v417, 0.0
    %v436 = vpack.c.bf16 %v421, %v420
    %v437 = vpack.c.bf16 %v423, %v422
    %v438 = vpack.c.bf16 %v425, %v424
    %v439 = vpack.c.bf16 %v427, %v426
    %v440 = vpack.c.bf16 %v429, %v428
    %v441 = vpack.c.bf16 %v431, %v430
    %v442 = vpack.c.bf16 %v433, %v432
    %v443 = vpack.c.bf16 %v435, %v434
    %v444 = vlaneseq
    %v445 = vshrl.u32 %v444, 7
    %v446 = vsub.s32 0, %v445
    %v447 = vrot.slane %v63, %v446
    %v452 = vunpack.c.l.b16 %v58
    %v453 = vunpack.c.l.b16 %v59
    %v454 = vunpack.c.l.b16 %v60
    %v455 = vunpack.c.l.b16 %v61
    %v456 = vpack.c.b16 %v453, %v452
    %v457 = vpack.c.b16 %v455, %v454
    %v461 = vsel %vm124, %v436, 0
    %v464 = vsel %vm124, %v437, 0
    %v467 = vsel %vm124, %v438, 0
    %v470 = vsel %vm124, %v439, 0
    %v473 = vsel %vm124, %v440, 0
    %v476 = vsel %vm124, %v441, 0
    %v479 = vsel %vm124, %v442, 0
    %v482 = vsel %vm124, %v443, 0
    %484 = vmatprep.subr.bf16.mxu0 0
    %485 = vmatpush1.bf16.msra.mxu0 %v456
    %486 = vmatprep.subr.bf16.mxu0 0
    %487 = vmatpush1.bf16.msra.mxu0 %v457
    %488 = vmatprep.subr.bf16.mxu0 0
    %489 = vmatpush1.bf16.msra.mxu0 0
    %490 = vmatprep.subr.bf16.mxu0 0
    %491 = vmatpush1.bf16.msra.mxu0 0
    %492 = vmatprep.subr.bf16.mxu0 0
    %493 = vmatpush1.bf16.msra.mxu0 0
    %494 = vmatprep.subr.bf16.mxu0 0
    %495 = vmatpush1.bf16.msra.mxu0 0
    %496 = vmatprep.subr.bf16.mxu0 0
    %497 = vmatpush1.bf16.msra.mxu0 0
    %498 = vmatprep.subr.bf16.mxu0 0
    %499 = vmatpush1.bf16.msra.mxu0 0
    %500 = vmatprep.subr.bf16.mxu0 0
    %501 = vmatpush1.bf16.msra.mxu0 0
    %502 = vmatprep.subr.bf16.mxu0 0
    %503 = vmatpush1.bf16.msra.mxu0 0
    %504 = vmatprep.subr.bf16.mxu0 0
    %505 = vmatpush1.bf16.msra.mxu0 0
    %506 = vmatprep.subr.bf16.mxu0 0
    %507 = vmatpush1.bf16.msra.mxu0 0
    %508 = vmatprep.subr.bf16.mxu0 0
    %509 = vmatpush1.bf16.msra.mxu0 0
    %510 = vmatprep.subr.bf16.mxu0 0
    %511 = vmatpush1.bf16.msra.mxu0 0
    %512 = vmatprep.subr.bf16.mxu0 0
    %513 = vmatpush1.bf16.msra.mxu0 0
    %514 = vmatprep.subr.bf16.mxu0 0
    %515 = vmatpush1.bf16.msra.mxu0 0
    %516 = vmatprep.mubr.bf16.mxu0 0
    %517 = vmatmul.mubr.bf16.gmra.mrb[0].mxu0 %v461
    %v518 = vpop.f32.mrb[0].mxu0
    %v519 = vadd.f32 %v447, %v518
    %v520 = vpop.f32.mrb[0].mxu0
    %v521 = vpop.f32.mrb[0].mxu0
    %v522 = vadd.f32 %v447, %v521
    %v523 = vpop.f32.mrb[0].mxu0
    %524 = vmatprep.mubr.bf16.mxu0 0
    %525 = vmatmul.mubr.bf16.gmra.mrb[0].mxu0 %v464
    %v526 = vpop.f32.mrb[0].mxu0
    %v527 = vadd.f32 %v447, %v526
    %v528 = vpop.f32.mrb[0].mxu0
    %v529 = vpop.f32.mrb[0].mxu0
    %v530 = vadd.f32 %v447, %v529
    %v531 = vpop.f32.mrb[0].mxu0
    %532 = vmatprep.mubr.bf16.mxu0 0
    %533 = vmatmul.mubr.bf16.gmra.mrb[0].mxu0 %v467
    %v534 = vpop.f32.mrb[0].mxu0
    %v535 = vadd.f32 %v447, %v534
    %v536 = vpop.f32.mrb[0].mxu0
    %v537 = vpop.f32.mrb[0].mxu0
    %v538 = vadd.f32 %v447, %v537
    %v539 = vpop.f32.mrb[0].mxu0
    %540 = vmatprep.mubr.bf16.mxu0 0
    %541 = vmatmul.mubr.bf16.gmra.mrb[0].mxu0 %v470
    %v542 = vpop.f32.mrb[0].mxu0
    %v543 = vadd.f32 %v447, %v542
    %v544 = vpop.f32.mrb[0].mxu0
    %v545 = vpop.f32.mrb[0].mxu0
    %v546 = vadd.f32 %v447, %v545
    %v547 = vpop.f32.mrb[0].mxu0
    %548 = vmatprep.mubr.bf16.mxu0 0
    %549 = vmatmul.mubr.bf16.gmra.mrb[0].mxu0 %v473
    %v550 = vpop.f32.mrb[0].mxu0
    %v551 = vadd.f32 %v447, %v550
    %v552 = vpop.f32.mrb[0].mxu0
    %v553 = vpop.f32.mrb[0].mxu0
    %v554 = vadd.f32 %v447, %v553
    %v555 = vpop.f32.mrb[0].mxu0
    %556 = vmatprep.mubr.bf16.mxu0 0
    %557 = vmatmul.mubr.bf16.gmra.mrb[0].mxu0 %v476
    %v558 = vpop.f32.mrb[0].mxu0
    %v559 = vadd.f32 %v447, %v558
    %v560 = vpop.f32.mrb[0].mxu0
    %v561 = vpop.f32.mrb[0].mxu0
    %v562 = vadd.f32 %v447, %v561
    %v563 = vpop.f32.mrb[0].mxu0
    %564 = vmatprep.mubr.bf16.mxu0 0
    %565 = vmatmul.mubr.bf16.gmra.mrb[0].mxu0 %v479
    %v566 = vpop.f32.mrb[0].mxu0
    %v567 = vadd.f32 %v447, %v566
    %v568 = vpop.f32.mrb[0].mxu0
    %v569 = vpop.f32.mrb[0].mxu0
    %v570 = vadd.f32 %v447, %v569
    %v571 = vpop.f32.mrb[0].mxu0
    %572 = vmatprep.mubr.bf16.mxu0 0
    %573 = vmatmul.mubr.bf16.gmra.mrb[0].mxu0 %v482
    %v574 = vpop.f32.mrb[0].mxu0
    %v575 = vadd.f32 %v447, %v574
    %v576 = vpop.f32.mrb[0].mxu0
    %v577 = vpop.f32.mrb[0].mxu0
    %v578 = vadd.f32 %v447, %v577
    %v579 = vpop.f32.mrb[0].mxu0
    %580 = vdwg.mxu0
    %v581 = vmax.f32 %v519, 0.0
    %v582 = vmax.f32 %v522, 0.0
    %v583 = vmax.f32 %v527, 0.0
    %v584 = vmax.f32 %v530, 0.0
    %v585 = vmax.f32 %v535, 0.0
    %v586 = vmax.f32 %v538, 0.0
    %v587 = vmax.f32 %v543, 0.0
    %v588 = vmax.f32 %v546, 0.0
    %v589 = vmax.f32 %v551, 0.0
    %v590 = vmax.f32 %v554, 0.0
    %v591 = vmax.f32 %v559, 0.0
    %v592 = vmax.f32 %v562, 0.0
    %v593 = vmax.f32 %v567, 0.0
    %v594 = vmax.f32 %v570, 0.0
    %v595 = vmax.f32 %v575, 0.0
    %v596 = vmax.f32 %v578, 0.0
    %v597 = vlaneseq
    %v598 = vshrl.u32 %v597, 7
    %v599 = vsub.s32 0, %v598
    %v600 = vrot.slane %v65, %v599
    %v601 = vmul.f32 %v581, %v600
    %v602 = vmul.f32 %v582, %v600
    %v603 = vmul.f32 %v583, %v600
    %v604 = vmul.f32 %v584, %v600
    %v605 = vmul.f32 %v585, %v600
    %v606 = vmul.f32 %v586, %v600
    %v607 = vmul.f32 %v587, %v600
    %v608 = vmul.f32 %v588, %v600
    %v609 = vmul.f32 %v589, %v600
    %v610 = vmul.f32 %v590, %v600
    %v611 = vmul.f32 %v591, %v600
    %v612 = vmul.f32 %v592, %v600
    %v613 = vmul.f32 %v593, %v600
    %v614 = vmul.f32 %v594, %v600
    %v615 = vmul.f32 %v595, %v600
    %v616 = vmul.f32 %v596, %v600
    %vm617 = vcmask 64512
    %v618 = vsel %vm617, %v601, 0.0
    %619 = vadd.xlane.f32.xlu0 %v618
    %v620 = vpop.xlane.xlu0 %619
    %v621 = vsel %vm617, %v602, 0.0
    %622 = vadd.xlane.f32.xlu0 %v621
    %v623 = vpop.xlane.xlu0 %622
    %v624 = vsel %vm617, %v603, 0.0
    %625 = vadd.xlane.f32.xlu0 %v624
    %v626 = vpop.xlane.xlu0 %625
    %v627 = vsel %vm617, %v604, 0.0
    %628 = vadd.xlane.f32.xlu0 %v627
    %v629 = vpop.xlane.xlu0 %628
    %v630 = vsel %vm617, %v605, 0.0
    %631 = vadd.xlane.f32.xlu0 %v630
    %v632 = vpop.xlane.xlu0 %631
    %v633 = vsel %vm617, %v606, 0.0
    %634 = vadd.xlane.f32.xlu0 %v633
    %v635 = vpop.xlane.xlu0 %634
    %v636 = vsel %vm617, %v607, 0.0
    %637 = vadd.xlane.f32.xlu0 %v636
    %v638 = vpop.xlane.xlu0 %637
    %v639 = vsel %vm617, %v608, 0.0
    %640 = vadd.xlane.f32.xlu0 %v639
    %v641 = vpop.xlane.xlu0 %640
    %v642 = vsel %vm617, %v609, 0.0
    %643 = vadd.xlane.f32.xlu0 %v642
    %v644 = vpop.xlane.xlu0 %643
    %v645 = vsel %vm617, %v610, 0.0
    %646 = vadd.xlane.f32.xlu0 %v645
    %v647 = vpop.xlane.xlu0 %646
    %v648 = vsel %vm617, %v611, 0.0
    %649 = vadd.xlane.f32.xlu0 %v648
    %v650 = vpop.xlane.xlu0 %649
    %v651 = vsel %vm617, %v612, 0.0
    %652 = vadd.xlane.f32.xlu0 %v651
    %v653 = vpop.xlane.xlu0 %652
    %v654 = vsel %vm617, %v613, 0.0
    %655 = vadd.xlane.f32.xlu0 %v654
    %v656 = vpop.xlane.xlu0 %655
    %v657 = vsel %vm617, %v614, 0.0
    %658 = vadd.xlane.f32.xlu0 %v657
    %v659 = vpop.xlane.xlu0 %658
    %v660 = vsel %vm617, %v615, 0.0
    %661 = vadd.xlane.f32.xlu0 %v660
    %v662 = vpop.xlane.xlu0 %661
    %v663 = vsel %vm617, %v616, 0.0
    %664 = vadd.xlane.f32.xlu0 %v663
    %v665 = vpop.xlane.xlu0 %664
    %v666 = vlaneseq
    %v667 = vshrl.u32 %v666, 7
    %v668 = vsub.s32 0, %v667
    %v669 = vrot.slane %v67, %v668
    %v670 = vadd.f32 %v620, %v669
    %v671 = vadd.f32 %v623, %v669
    %v672 = vadd.f32 %v626, %v669
    %v673 = vadd.f32 %v629, %v669
    %v674 = vadd.f32 %v632, %v669
    %v675 = vadd.f32 %v635, %v669
    %v676 = vadd.f32 %v638, %v669
    %v677 = vadd.f32 %v641, %v669
    %v678 = vadd.f32 %v644, %v669
    %v679 = vadd.f32 %v647, %v669
    %v680 = vadd.f32 %v650, %v669
    %v681 = vadd.f32 %v653, %v669
    %v682 = vadd.f32 %v656, %v669
    %v683 = vadd.f32 %v659, %v669
    %v684 = vadd.f32 %v662, %v669
    %v685 = vadd.f32 %v665, %v669
    %v686 = vmax.f32 %v670, 0.0
    %v687 = vmax.f32 %v671, 0.0
    %v688 = vmax.f32 %v672, 0.0
    %v689 = vmax.f32 %v673, 0.0
    %v690 = vmax.f32 %v674, 0.0
    %v691 = vmax.f32 %v675, 0.0
    %v692 = vmax.f32 %v676, 0.0
    %v693 = vmax.f32 %v677, 0.0
    %v694 = vmax.f32 %v678, 0.0
    %v695 = vmax.f32 %v679, 0.0
    %v696 = vmax.f32 %v680, 0.0
    %v697 = vmax.f32 %v681, 0.0
    %v698 = vmax.f32 %v682, 0.0
    %v699 = vmax.f32 %v683, 0.0
    %v700 = vmax.f32 %v684, 0.0
    %v701 = vmax.f32 %v685, 0.0
    %v702 = vxor.u32 %v686, 2147483648
    %v703 = vxor.u32 %v687, 2147483648
    %v704 = vxor.u32 %v688, 2147483648
    %v705 = vxor.u32 %v689, 2147483648
    %v706 = vxor.u32 %v690, 2147483648
    %v707 = vxor.u32 %v691, 2147483648
    %v708 = vxor.u32 %v692, 2147483648
    %v709 = vxor.u32 %v693, 2147483648
    %v710 = vxor.u32 %v694, 2147483648
    %v711 = vxor.u32 %v695, 2147483648
    %v712 = vxor.u32 %v696, 2147483648
    %v713 = vxor.u32 %v697, 2147483648
    %v714 = vxor.u32 %v698, 2147483648
    %v715 = vxor.u32 %v699, 2147483648
    %v716 = vxor.u32 %v700, 2147483648
    %v717 = vxor.u32 %v701, 2147483648
    %v718 = vmul.f32 %v702, 1.442695
    %v719 = vpow.pop %v718
    %v720 = vmul.f32 %v703, 1.442695
    %v721 = vpow.pop %v720
    %v722 = vmul.f32 %v704, 1.442695
    %v723 = vpow.pop %v722
    %v724 = vmul.f32 %v705, 1.442695
    %v725 = vpow.pop %v724
    %v726 = vmul.f32 %v706, 1.442695
    %v727 = vpow.pop %v726
    %v728 = vmul.f32 %v707, 1.442695
    %v729 = vpow.pop %v728
    %v730 = vmul.f32 %v708, 1.442695
    %v731 = vpow.pop %v730
    %v732 = vmul.f32 %v709, 1.442695
    %v733 = vpow.pop %v732
    %v734 = vmul.f32 %v710, 1.442695
    %v735 = vpow.pop %v734
    %v736 = vmul.f32 %v711, 1.442695
    %v737 = vpow.pop %v736
    %v738 = vmul.f32 %v712, 1.442695
    %v739 = vpow.pop %v738
    %v740 = vmul.f32 %v713, 1.442695
    %v741 = vpow.pop %v740
    %v742 = vmul.f32 %v714, 1.442695
    %v743 = vpow.pop %v742
    %v744 = vmul.f32 %v715, 1.442695
    %v745 = vpow.pop %v744
    %v746 = vmul.f32 %v716, 1.442695
    %v747 = vpow.pop %v746
    %v748 = vmul.f32 %v717, 1.442695
    %v749 = vpow.pop %v748
    %v750 = vadd.f32 %v719, 1.0
    %v751 = vadd.f32 %v721, 1.0
    %v752 = vadd.f32 %v723, 1.0
    %v753 = vadd.f32 %v725, 1.0
    %v754 = vadd.f32 %v727, 1.0
    %v755 = vadd.f32 %v729, 1.0
    %v756 = vadd.f32 %v731, 1.0
    %v757 = vadd.f32 %v733, 1.0
    %v758 = vadd.f32 %v735, 1.0
    %v759 = vadd.f32 %v737, 1.0
    %v760 = vadd.f32 %v739, 1.0
    %v761 = vadd.f32 %v741, 1.0
    %v762 = vadd.f32 %v743, 1.0
    %v763 = vadd.f32 %v745, 1.0
    %v764 = vadd.f32 %v747, 1.0
    %v765 = vadd.f32 %v749, 1.0
    %v766 = vrcp.pop %v750
    %v767 = vmul.f32 1.0, %v766
    %v768 = vrcp.pop %v751
    %v769 = vmul.f32 1.0, %v768
    %v770 = vrcp.pop %v752
    %v771 = vmul.f32 1.0, %v770
    %v772 = vrcp.pop %v753
    %v773 = vmul.f32 1.0, %v772
    %v774 = vrcp.pop %v754
    %v775 = vmul.f32 1.0, %v774
    %v776 = vrcp.pop %v755
    %v777 = vmul.f32 1.0, %v776
    %v778 = vrcp.pop %v756
    %v779 = vmul.f32 1.0, %v778
    %v780 = vrcp.pop %v757
    %v781 = vmul.f32 1.0, %v780
    %v782 = vrcp.pop %v758
    %v783 = vmul.f32 1.0, %v782
    %v784 = vrcp.pop %v759
    %v785 = vmul.f32 1.0, %v784
    %v786 = vrcp.pop %v760
    %v787 = vmul.f32 1.0, %v786
    %v788 = vrcp.pop %v761
    %v789 = vmul.f32 1.0, %v788
    %v790 = vrcp.pop %v762
    %v791 = vmul.f32 1.0, %v790
    %v792 = vrcp.pop %v763
    %v793 = vmul.f32 1.0, %v792
    %v794 = vrcp.pop %v764
    %v795 = vmul.f32 1.0, %v794
    %v796 = vrcp.pop %v765
    %v797 = vmul.f32 1.0, %v796
    %799 = vset.pattern.permute.xlu0 0
    %800 = vperm.xlu0 %799, %v767
    %v801 = vpop.permute.xlu0 %800
    %804 = vset.pattern.permute.xlu0 0
    %805 = vperm.xlu0 %804, %v769
    %v806 = vpop.permute.xlu0 %805
    %809 = vset.pattern.permute.xlu0 0
    %810 = vperm.xlu0 %809, %v771
    %v811 = vpop.permute.xlu0 %810
    %814 = vset.pattern.permute.xlu0 0
    %815 = vperm.xlu0 %814, %v773
    %v816 = vpop.permute.xlu0 %815
    %819 = vset.pattern.permute.xlu0 0
    %820 = vperm.xlu0 %819, %v775
    %v821 = vpop.permute.xlu0 %820
    %824 = vset.pattern.permute.xlu0 0
    %825 = vperm.xlu0 %824, %v777
    %v826 = vpop.permute.xlu0 %825
    %829 = vset.pattern.permute.xlu0 0
    %830 = vperm.xlu0 %829, %v779
    %v831 = vpop.permute.xlu0 %830
    %834 = vset.pattern.permute.xlu0 0
    %835 = vperm.xlu0 %834, %v781
    %v836 = vpop.permute.xlu0 %835
    %839 = vset.pattern.permute.xlu0 0
    %840 = vperm.xlu0 %839, %v783
    %v841 = vpop.permute.xlu0 %840
    %844 = vset.pattern.permute.xlu0 0
    %845 = vperm.xlu0 %844, %v785
    %v846 = vpop.permute.xlu0 %845
    %849 = vset.pattern.permute.xlu0 0
    %850 = vperm.xlu0 %849, %v787
    %v851 = vpop.permute.xlu0 %850
    %854 = vset.pattern.permute.xlu0 0
    %855 = vperm.xlu0 %854, %v789
    %v856 = vpop.permute.xlu0 %855
    %859 = vset.pattern.permute.xlu0 0
    %860 = vperm.xlu0 %859, %v791
    %v861 = vpop.permute.xlu0 %860
    %864 = vset.pattern.permute.xlu0 0
    %865 = vperm.xlu0 %864, %v793
    %v866 = vpop.permute.xlu0 %865
    %869 = vset.pattern.permute.xlu0 0
    %870 = vperm.xlu0 %869, %v795
    %v871 = vpop.permute.xlu0 %870
    %874 = vset.pattern.permute.xlu0 0
    %875 = vperm.xlu0 %874, %v797
    %v876 = vpop.permute.xlu0 %875
    %878 = vst.msk [vmem:[%s2] sm:$0xff] %vm617, %v801
    %879 = vst.msk [vmem:[%s2 + $0x8] sm:$0xff] %vm617, %v806
    %880 = vst.msk [vmem:[%s2 + $0x10] sm:$0xff] %vm617, %v811
    %881 = vst.msk [vmem:[%s2 + $0x18] sm:$0xff] %vm617, %v816
    %882 = vst.msk [vmem:[%s2 + $0x20] sm:$0xff] %vm617, %v821
    %883 = vst.msk [vmem:[%s2 + $0x28] sm:$0xff] %vm617, %v826
    %884 = vst.msk [vmem:[%s2 + $0x30] sm:$0xff] %vm617, %v831
    %885 = vst.msk [vmem:[%s2 + $0x38] sm:$0xff] %vm617, %v836
    %886 = vst.msk [vmem:[%s2 + $0x40] sm:$0xff] %vm617, %v841
    %887 = vst.msk [vmem:[%s2 + $0x48] sm:$0xff] %vm617, %v846
    %888 = vst.msk [vmem:[%s2 + $0x50] sm:$0xff] %vm617, %v851
    %889 = vst.msk [vmem:[%s2 + $0x58] sm:$0xff] %vm617, %v856
    %890 = vst.msk [vmem:[%s2 + $0x60] sm:$0xff] %vm617, %v861
    %891 = vst.msk [vmem:[%s2 + $0x68] sm:$0xff] %vm617, %v866
    %892 = vst.msk [vmem:[%s2 + $0x70] sm:$0xff] %vm617, %v871
    %893 = vst.msk [vmem:[%s2 + $0x78] sm:$0xff] %vm617, %v876
    // Predicated region
    $region14: #{tpu_custom_call.1} parent=1 // pred_check
      _
    $region15: #{tpu_custom_call.1} parent=1 // pred_check_branch
      %895 = sbr.rel (0) target = $region17
    $region16: #{tpu_custom_call.1} parent=1 // pred_region
      _
    $region17: #{tpu_custom_call.1} parent=1 // pred_fallthru
      _
    // Predicated region
    $region18: #{tpu_custom_call.1} parent=1 // pred_check
      _
    $region19: #{tpu_custom_call.1} parent=1 // pred_check_branch
      %897 = sbr.rel (0) target = $region21
    $region20: #{tpu_custom_call.1} parent=1 // pred_region
      _
    $region21: #{tpu_custom_call.1} parent=1 // pred_fallthru
      _
    %898 = vsyncpa [#allocation3], 1

</llo_original>
